<compile_context>
chip_gen: v7x
topology: tpu7x:2x2x1
jax: 0.10.0
libtpu: 0.0.40
codegen_flags: <defaults>
</compile_context>

<pallas_src>
from functools import partial

import jax
import jax.numpy as jnp
from jax.experimental import pallas as pl
from jax.experimental.pallas import tpu as pltpu


def _rope_cache_kernel(arg_ref, phase_ref, out_ref, *, tile_s, attention_scaling):
    # arg_ref   : (1, 2*head_dim)  = [inv_freq, inv_freq | inv_freq, inv_freq]
    # phase_ref : (1, 2*head_dim)  = [0 ... 0 | -pi/2 ... -pi/2]
    # out_ref   : (tile_s, 2*head_dim) fused [cos | sin] tile for this grid step
    i = pl.program_id(0)

    # positions t for this tile (int32 iota -> f32, matches torch.arange(int32))
    t = (i * tile_s
         + jax.lax.broadcasted_iota(jnp.int32, (tile_s, 1), 0)).astype(jnp.float32)

    # One lane-dense EUP pass produces the whole cos|sin slab:
    #   cos(t*f)            for the cos half   (phase 0)
    #   cos(t*f - pi/2)     = sin(t*f) for the sin half
    slab = jnp.cos(t * arg_ref[...] + phase_ref[...])

    if attention_scaling != 1.0:   # static Python branch; skipped when == 1.0
        slab = slab * attention_scaling

    out_ref[...] = slab.astype(out_ref.dtype)


def gaudi_llama_rotary_embedding(x, seq_len, *, head_dim, rope_theta=10000.0,
                                 attention_scaling=1.0, tile_s=512):
    """Returns (cos, sin), each of shape [seq_len, head_dim] in x.dtype."""
    two_hd = 2 * head_dim

    # default rope init (ROPE_INIT_FUNCTIONS['default']): plain JAX glue.
    inv_freq = 1.0 / (rope_theta ** (jnp.arange(0, head_dim, 2, dtype=jnp.float32)
                                     / head_dim))                      # (head_dim//2,)
    # Fused arg table + phase row so the kernel needs no concatenate and a
    # single cos() covers both halves.
    arg = jnp.concatenate([inv_freq, inv_freq, inv_freq, inv_freq]).reshape(1, two_hd)
    phase = jnp.concatenate(
        [jnp.zeros((head_dim,), jnp.float32),
         jnp.full((head_dim,), -jnp.pi / 2.0, dtype=jnp.float32)]).reshape(1, two_hd)

    dtype = x.dtype

    # Tile sizing: big tiles amortize per-step overhead; keep >= 2 grid steps
    # (v7x megacore) when possible; sublane-align to 8; ragged seq handled by
    # padding the output rows and slicing in the wrapper.
    tile_s = min(int(tile_s), max(8, pl.cdiv(seq_len, 2)))
    tile_s = max(8, (tile_s // 8) * 8)
    grid_s = pl.cdiv(seq_len, tile_s)
    padded_seq = grid_s * tile_s

    kernel = partial(_rope_cache_kernel, tile_s=tile_s,
                     attention_scaling=float(attention_scaling))

    slab = pl.pallas_call(
        kernel,
        out_shape=jax.ShapeDtypeStruct((padded_seq, two_hd), dtype),
        grid_spec=pltpu.PrefetchScalarGridSpec(
            num_scalar_prefetch=0,
            grid=(grid_s,),
            in_specs=[pl.BlockSpec((1, two_hd), lambda i: (0, 0)),
                      pl.BlockSpec((1, two_hd), lambda i: (0, 0))],
            out_specs=pl.BlockSpec((tile_s, two_hd), lambda i: (i, 0)),
        ),
        compiler_params=pltpu.CompilerParams(
            dimension_semantics=("parallel",),
            vmem_limit_bytes=32 << 20),
    )(arg, phase)

    cos = slab[:seq_len, :head_dim]
    sin = slab[:seq_len, head_dim:]
    return cos, sin


def _reference(x, seq_len, head_dim, rope_theta=10000.0, attention_scaling=1.0):
    inv_freq = 1.0 / (rope_theta ** (jnp.arange(0, head_dim, 2, dtype=jnp.float32) / head_dim))
    t = jnp.arange(seq_len, dtype=jnp.int32).astype(jnp.float32)
    freqs = jnp.outer(t, inv_freq)
    emb = jnp.concatenate([freqs, freqs], axis=-1)
    return (jnp.cos(emb) * attention_scaling).astype(x.dtype), \
           (jnp.sin(emb) * attention_scaling).astype(x.dtype)


if __name__ == "__main__":
    # Small LlamaConfig-like setup: hidden_size=256, num_attention_heads=4 -> head_dim=64,
    # max_position_embeddings=128, rope_theta=10000, no rope_scaling -> default rope.
    head_dim = 64
    seq_len = 128
    rope_theta = 10000.0

    key = jax.random.PRNGKey(0)
    # x is only used for its dtype in the forward; give it an attention-input-like shape.
    x = jax.random.normal(key, (2, seq_len, 4 * head_dim), dtype=jnp.float32)

    cos, sin = gaudi_llama_rotary_embedding(
        x, seq_len, head_dim=head_dim, rope_theta=rope_theta)
    jax.block_until_ready((cos, sin))

    cos_ref, sin_ref = _reference(x, seq_len, head_dim, rope_theta)
    assert cos.shape == (seq_len, head_dim) and sin.shape == (seq_len, head_dim)
    assert jnp.allclose(cos, cos_ref, atol=1e-5, rtol=1e-5)
    assert jnp.allclose(sin, sin_ref, atol=1e-5, rtol=1e-5)

    # Ragged sequence length (not a multiple of the tile): exercised via the
    # cdiv-grid + wrapper padding path.
    seq_len2 = 100
    cos2, sin2 = gaudi_llama_rotary_embedding(
        x, seq_len2, head_dim=head_dim, rope_theta=rope_theta)
    jax.block_until_ready((cos2, sin2))
    cos2_ref, sin2_ref = _reference(x, seq_len2, head_dim, rope_theta)
    assert cos2.shape == (seq_len2, head_dim) and sin2.shape == (seq_len2, head_dim)
    assert jnp.allclose(cos2, cos2_ref, atol=1e-5, rtol=1e-5)
    assert jnp.allclose(sin2, sin2_ref, atol=1e-5, rtol=1e-5)

    print("KERNEL_OK")
</pallas_src>

<mosaic_0001>
module attributes {stable_mosaic.version = 11 : i64} {
  func.func @_rope_cache_kernel(%arg0: i32, %arg1: memref<1x128xf32, #tpu.memory_space<vmem>>, %arg2: memref<1x128xf32, #tpu.memory_space<vmem>>, %arg3: memref<64x128xf32, #tpu.memory_space<vmem>>) attributes {dimension_semantics = [#tpu.dimension_semantics<parallel>], iteration_bounds = array<i64: 2>, scalar_prefetch = 0 : i64, scratch_operands = 0 : i64, tpu.core_type = #tpu.core_type<tc>, window_params = [{pipeline_mode = #tpu.pipeline_mode<synchronous>, transform_indices = @transform_0, window_bounds = array<i64: 1, 128>}, {pipeline_mode = #tpu.pipeline_mode<synchronous>, transform_indices = @transform_1, window_bounds = array<i64: 1, 128>}, {transform_indices = @transform_2, window_bounds = array<i64: 64, 128>}]} {
    %c64_i32 = arith.constant 64 : i32
    %0 = arith.muli %arg0, %c64_i32 : i32
    %1 = tpu.iota {dimensions = array<i32: 0>} : vector<64x1xi32>
    %2 = vector.broadcast %0 : i32 to vector<64x1xi32>
    %3 = arith.addi %2, %1 : vector<64x1xi32>
    %4 = arith.sitofp %3 : vector<64x1xi32> to vector<64x1xf32>
    %c0 = arith.constant 0 : index
    %c0_0 = arith.constant 0 : index
    %5 = vector.load %arg1[%c0, %c0_0] : memref<1x128xf32, #tpu.memory_space<vmem>>, vector<1x128xf32>
    %6 = vector.broadcast %4 : vector<64x1xf32> to vector<64x128xf32>
    %7 = vector.broadcast %5 : vector<1x128xf32> to vector<64x128xf32>
    %8 = arith.mulf %6, %7 : vector<64x128xf32>
    %c0_1 = arith.constant 0 : index
    %c0_2 = arith.constant 0 : index
    %9 = vector.load %arg2[%c0_1, %c0_2] : memref<1x128xf32, #tpu.memory_space<vmem>>, vector<1x128xf32>
    %10 = vector.broadcast %9 : vector<1x128xf32> to vector<64x128xf32>
    %11 = arith.addf %8, %10 : vector<64x128xf32>
    %12 = math.cos %11 : vector<64x128xf32>
    %c0_3 = arith.constant 0 : index
    %c0_4 = arith.constant 0 : index
    %13 = vector.load %arg3[%c0_3, %c0_4] : memref<64x128xf32, #tpu.memory_space<vmem>>, vector<64x128xf32>
    tpu.vector_store %arg3[%c0_3, %c0_4], %12 {strides = array<i32>} : memref<64x128xf32, #tpu.memory_space<vmem>>, vector<64x128xf32>,
    return
  }
  func.func @transform_0(%arg0: i32) -> (i32, i32) {
    %c0_i32 = arith.constant 0 : i32
    %c0_i32_0 = arith.constant 0 : i32
    %c0_i32_1 = arith.constant 0 : i32
    return %c0_i32, %c0_i32_0 : i32, i32
  }
  func.func @transform_1(%arg0: i32) -> (i32, i32) {
    %c0_i32 = arith.constant 0 : i32
    %c0_i32_0 = arith.constant 0 : i32
    %c0_i32_1 = arith.constant 0 : i32
    return %c0_i32, %c0_i32_0 : i32, i32
  }
  func.func @transform_2(%arg0: i32) -> (i32, i32) {
    %c0_i32 = arith.constant 0 : i32
    %c0_i32_0 = arith.constant 0 : i32
    return %arg0, %c0_i32 : i32, i32
  }
}

</mosaic_0001>

<llo_original>
// kernel: tpu_custom_call.1
$region0: #{tpu_custom_call.1}
  #allocation0 [shape = 'u32[]', space=smem, size = 0x4, offset = 0x4, fixed_abs, tag = 'smem constant byte address 0x4 - core index']
  #allocation1 [shape = 'u32[144,128]{1,0:T(1,128)}', space=vmem, size = 0x12000, scoped, tag = 'internal scratch']
  %s0 = inlined_call_operand.hbm [shape: f32[1,128], index: 0, kind: input, shape index: {}]
  %s1 = inlined_call_operand.vmem [shape: f32[1,128], index: 1, kind: input, shape index: {}]
  %s2 = inlined_call_operand.hbm [shape: f32[128,128], index: 2, kind: output, shape index: {}]
  %s3 = sld [smem:[#allocation0]]
  $region45: #{tpu_custom_call.1} parent=0
    _
  %s5 = ssub.s32 1, %s3
  %s6 = scalar_select 0, %s5, %s3
  $region1: #{tpu_custom_call.1} parent=0
    #allocation2 [shape = 'u8[512]{0}', space=vmem, size = 0x400, scoped, tag = 'input window, operand 0, single buffered']
    #allocation3 [shape = 's32[2]{0}', space=sflag, size = 0x8, scoped, tag = 'scoped memory for tpu_custom_call.1']
    #allocation4 [shape = 's32[2]{0}', space=sflag, size = 0x8, scoped, tag = 'scoped memory for tpu_custom_call.1']
    #allocation5 [shape = 'u8[65536]{0}', space=vmem, size = 0x10000, scoped, tag = 'output window, operand 0']
    %7 = vsyncpa [#allocation3], 0
    %8 = vsyncpa [#allocation4], 0
    %s9 = scalar_lea.sflag [#allocation4], 1
    %10 = vsyncpa %s9, 0
    loop: start=0, step=1, limit=4
    $region2: #{tpu_custom_call.1} parent=1 // loop_pre_header
      _
    $region3: #{tpu_custom_call.1} parent=1 // loop_header
      %s12 = sphi 0, %s16
      %p13 = scmp.ge.s32.totalorder %s12, 4
      %s20 = sphi 0, %s20
      %s22 = sphi 0, %s20
      %s23 = sphi 0, %s22
      %s37 = sphi 0, %s23
      %s41 = sphi 0, %s41
      %s43 = sphi 0, %s41
      %s44 = sphi 0, %s43
      %s58 = sphi 0, %s44
      %s64 = sphi 0, %s66
      %s67 = sphi 0, %s64
      %s68 = sphi 0, %s67
      %s84 = sphi 0, %s68
    $region4: #{tpu_custom_call.1} parent=1 // loop_header_branch
      %15 = sbr.rel (%p13) target = $region8
    $region5: #{tpu_custom_call.1} parent=1 // loop_body
      %s17 = ssub.s32 %s12, 1
      %s18 = ssub.s32 %s12, 2
      %s19 = sadd.s32 %s12, 1
      %s21 = sadd.s32 %s20, 1
      %p24 = scmp.eq.s32.totalorder %s12, 1
      %p25 = scmp.ne.s32.totalorder %s20, %s22
      %p26 = scmp.eq.s32.totalorder %s12, 0
      %p27 = por %p25, %p26
      %p28 = scmp.ne.s32.totalorder %s20, %s22
      %p29 = scmp.eq.s32.totalorder %s17, 1
      %p30 = por %p28, %p29
      %p31 = scmp.ne.s32.totalorder %s22, %s23
      %p32 = scmp.eq.s32.totalorder %s17, 0
      %p33 = por %p31, %p32
      %p34 = scmp.ne.s32.totalorder %s22, %s23
      %p35 = scmp.eq.s32.totalorder %s18, 1
      %p36 = por %p34, %p35
      %p38 = scmp.ne.s32.totalorder %s23, %s37
      %p39 = scmp.eq.s32.totalorder %s18, 0
      %p40 = por %p38, %p39
      %s42 = sadd.s32 %s41, 1
      %p45 = scmp.eq.s32.totalorder %s12, 1
      %p46 = scmp.ne.s32.totalorder %s41, %s43
      %p47 = scmp.eq.s32.totalorder %s12, 0
      %p48 = por %p46, %p47
      %p49 = scmp.ne.s32.totalorder %s41, %s43
      %p50 = scmp.eq.s32.totalorder %s17, 1
      %p51 = por %p49, %p50
      %p52 = scmp.ne.s32.totalorder %s43, %s44
      %p53 = scmp.eq.s32.totalorder %s17, 0
      %p54 = por %p52, %p53
      %p55 = scmp.ne.s32.totalorder %s43, %s44
      %p56 = scmp.eq.s32.totalorder %s18, 1
      %p57 = por %p55, %p56
      %p59 = scmp.ne.s32.totalorder %s44, %s58
      %p60 = scmp.eq.s32.totalorder %s18, 0
      %p61 = por %p59, %p60
      %s62 = ssub.s32 %s12, %s19
      %p63 = scmp.eq.s32.totalorder %s62, 0
      %s65 = sadd.s32 %s64, 1
      %s66 = scalar_select %p63, %s64, %s65
      %p69 = pneg %p63
      %p70 = scmp.eq.s32.totalorder %s12, 1
      %p71 = por %p69, %p70
      %p72 = scmp.ne.s32.totalorder %s64, %s67
      %p73 = scmp.eq.s32.totalorder %s12, 0
      %p74 = por %p72, %p73
      %p75 = scmp.ne.s32.totalorder %s64, %s67
      %p76 = scmp.eq.s32.totalorder %s17, 1
      %p77 = por %p75, %p76
      %p78 = scmp.ne.s32.totalorder %s67, %s68
      %p79 = scmp.eq.s32.totalorder %s17, 0
      %p80 = por %p78, %p79
      %p81 = scmp.ne.s32.totalorder %s67, %s68
      %p82 = scmp.eq.s32.totalorder %s18, 1
      %p83 = por %p81, %p82
      %p85 = scmp.ne.s32.totalorder %s68, %s84
      %p86 = scmp.eq.s32.totalorder %s18, 0
      %p87 = por %p85, %p86
      %p88 = scmp.le.s32.totalorder 1, %s12
      %p89 = scmp.lt.s32.totalorder %s12, 3
      %p90 = pnand %p88, %p89
      %p91 = pneg %p90
      // Predicated region
      $region9: #{tpu_custom_call.1} parent=5 // pred_check
        _
      $region10: #{tpu_custom_call.1} parent=5 // pred_check_branch
        %93 = sbr.rel (%p90) target = $region12
      $region11: #{tpu_custom_call.1} parent=5 // pred_region
        %s94 = ssub.s32 %s12, 1
        // Predicated region
        $region13: #{tpu_custom_call.1} parent=11 // pred_check
          %p95 = pneg %p33
        $region14: #{tpu_custom_call.1} parent=11 // pred_check_branch
          %97 = sbr.rel (%p95) target = $region16
        $region15: #{tpu_custom_call.1} parent=11 // pred_region
          %s99 = ssub.s32 16, 16
          %100 = vsyncadd [#allocation3], %s99
          %s102 = sshll.u32 [#allocation2], 4
          %s103 = int_to_ptr.vmem [resolvable:$true] %s102
          %105 = dma.hbm_to_vmem [thread:$0]  %s0, 16, %s103, [#allocation3]
        $region16: #{tpu_custom_call.1} parent=11 // pred_fallthru
          _
        // Predicated region
        $region17: #{tpu_custom_call.1} parent=11 // pred_check
          %p106 = pneg %p54
        $region18: #{tpu_custom_call.1} parent=11 // pred_check_branch
          %108 = sbr.rel (%p106) target = $region20
        $region19: #{tpu_custom_call.1} parent=11 // pred_region
          _
        $region20: #{tpu_custom_call.1} parent=11 // pred_fallthru
          _
      $region12: #{tpu_custom_call.1} parent=5 // pred_fallthru
        _
      %p109 = scmp.lt.s32.totalorder %s12, 2
      // Predicated region
      $region21: #{tpu_custom_call.1} parent=5 // pred_check
        %p110 = pneg %p109
      $region22: #{tpu_custom_call.1} parent=5 // pred_check_branch
        %112 = sbr.rel (%p110) target = $region24
      $region23: #{tpu_custom_call.1} parent=5 // pred_region
        _
      $region24: #{tpu_custom_call.1} parent=5 // pred_fallthru
        _
      %p113 = scmp.le.s32.totalorder 1, %s12
      %p114 = scmp.lt.s32.totalorder %s12, 3
      %p115 = pnand %p113, %p114
      %p116 = pneg %p115
      // Predicated region
      $region25: #{tpu_custom_call.1} parent=5 // pred_check
        _
      $region26: #{tpu_custom_call.1} parent=5 // pred_check_branch
        %118 = sbr.rel (%p115) target = $region28
      $region27: #{tpu_custom_call.1} parent=5 // pred_region
        %s119 = ssub.s32 %s12, 1
        // Predicated region
        $region29: #{tpu_custom_call.1} parent=27 // pred_check
          %p120 = pneg %p33
        $region30: #{tpu_custom_call.1} parent=27 // pred_check_branch
          %122 = sbr.rel (%p120) target = $region32
        $region31: #{tpu_custom_call.1} parent=27 // pred_region
          %123 = dma.done [#allocation3], 16
        $region32: #{tpu_custom_call.1} parent=27 // pred_fallthru
          _
        %p124 = pneg %p33
        %p125 = pneg %p30
        %p126 = pneg %p54
        %p127 = pneg %p51
        %p128 = pneg %p80
        %p129 = pneg %p77
        %s130 = sand.u32 %s67, 1
        %s131 = scalar_lea.sflag [#allocation4], %s130
        %s132 = sand.u32 %s67, 1
        %s133 = smul.addr %s132, 64
        %s134 = scalar_lea.vmem [#allocation5], %s133
        %s135 = smul.u32 8, %s17
        %s136 = smul.u32 %s17, 64
        %v137 = vlaneseq
        %v138 = vshrl.u32 %v137, 7
        %v139 = vadd.s32 %v138, 8
        %v140 = vadd.s32 %v138, 16
        %v141 = vadd.s32 %v138, 24
        %v142 = vadd.s32 %v138, 32
        %v143 = vadd.s32 %v138, 40
        %v144 = vadd.s32 %v138, 48
        %v145 = vadd.s32 %v138, 56
        %v146 = vstv %s136
        %v147 = vadd.s32 %v146, %v138
        %v148 = vadd.s32 %v146, %v139
        %v149 = vadd.s32 %v146, %v140
        %v150 = vadd.s32 %v146, %v141
        %v151 = vadd.s32 %v146, %v142
        %v152 = vadd.s32 %v146, %v143
        %v153 = vadd.s32 %v146, %v144
        %v154 = vadd.s32 %v146, %v145
        %v155 = vcvt.s32.f32 %v147
        %v156 = vcvt.s32.f32 %v148
        %v157 = vcvt.s32.f32 %v149
        %v158 = vcvt.s32.f32 %v150
        %v159 = vcvt.s32.f32 %v151
        %v160 = vcvt.s32.f32 %v152
        %v161 = vcvt.s32.f32 %v153
        %v162 = vcvt.s32.f32 %v154
        %v163 = vld [vmem:[#allocation2] sm:$0x1]
        %v165 = vlaneseq
        %v166 = vshrl.u32 %v165, 7
        %v167 = vsub.s32 0, %v166
        %v168 = vrot.slane %v163, %v167
        %v170 = vmul.f32 %v155, %v168
        %v171 = vmul.f32 %v156, %v168
        %v172 = vmul.f32 %v157, %v168
        %v173 = vmul.f32 %v158, %v168
        %v174 = vmul.f32 %v159, %v168
        %v175 = vmul.f32 %v160, %v168
        %v176 = vmul.f32 %v161, %v168
        %v177 = vmul.f32 %v162, %v168
        %v178 = vld [vmem:[%s1] sm:$0x1]
        %v180 = vlaneseq
        %v181 = vshrl.u32 %v180, 7
        %v182 = vsub.s32 0, %v181
        %v183 = vrot.slane %v178, %v182
        %v185 = vadd.f32 %v170, %v183
        %v186 = vadd.f32 %v171, %v183
        %v187 = vadd.f32 %v172, %v183
        %v188 = vadd.f32 %v173, %v183
        %v189 = vadd.f32 %v174, %v183
        %v190 = vadd.f32 %v175, %v183
        %v191 = vadd.f32 %v176, %v183
        %v192 = vadd.f32 %v177, %v183
        %v193 = vand.u32 2147483647, %v185
        %vm194 = vcmp.le.f32.partialorder %v193, 0.7853982
        %vm195 = vcmp.lt.s32.totalorder %v185, 0
        %v196 = vand.u32 %v185, 2139095040
        %v197 = vshrl.u32 %v196, 23
        %v198 = vsub.s32 %v197, 127
        %v199 = vand.u32 2147483647, %v185
        %v200 = vand.u32 %v199, 8388607
        %v201 = vor.u32 %v200, 8388608
        %v202 = vsub.s32 0, %v201
        %v203 = vadd.s32 %v198, 1
        %vm204 = vcmp.gt.s32.totalorder %v203, 0
        %v205 = vsel %vm204, %v203, 0
        %v206 = vshrl.u32 %v205, 5
        %v207 = vand.u32 %v205, 31
        %v208 = vsub.s32 32, %v207
        %v209 = vshrl.u32 683565275, %v208
        %v210 = vshll.u32 683565275, %v207
        %v211 = vshrl.u32 2475754826, %v208
        %v212 = vor.u32 %v210, %v211
        %v213 = vshll.u32 2475754826, %v207
        %v214 = vshrl.u32 2131351028, %v208
        %v215 = vor.u32 %v213, %v214
        %v216 = vshll.u32 2131351028, %v207
        %v217 = vshrl.u32 2102212464, %v208
        %v218 = vor.u32 %v216, %v217
        %v219 = vshll.u32 2102212464, %v207
        %v220 = vshrl.u32 920167782, %v208
        %v221 = vor.u32 %v219, %v220
        %v222 = vshll.u32 920167782, %v207
        %v223 = vshrl.u32 1326507024, %v208
        %v224 = vor.u32 %v222, %v223
        %vm225 = vcmp.lt.s32.totalorder %v206, 1
        %vm226 = vcmp.lt.s32.totalorder %v206, 2
        %vm227 = vcmp.lt.s32.totalorder %v206, 3
        %vm228 = vcmp.lt.s32.totalorder %v206, 4
        %v229 = vsel %vm225, %v209, %v212
        %v230 = vsel %vm228, %v218, 2102212464
        %v231 = vsel %vm227, %v215, %v230
        %v232 = vsel %vm226, %v229, %v231
        %v233 = vsel %vm225, %v212, %v215
        %v234 = vsel %vm228, %v221, 920167782
        %v235 = vsel %vm227, %v218, %v234
        %v236 = vsel %vm226, %v233, %v235
        %v237 = vsel %vm225, %v215, %v218
        %v238 = vsel %vm228, %v224, 1326507024
        %v239 = vsel %vm227, %v221, %v238
        %v240 = vsel %vm226, %v237, %v239
        %v241 = vshll.u32 %v201, 8
        %v242 = vmul.u32.u64.compose %v241, %v240
        %v243 = vextract.low.u32 %v242
        %v244 = vextract.high.u32 %v242
        %v245 = vmul.u32.u64.compose %v241, %v236
        %v246 = vextract.low.u32 %v245
        %v247 = vextract.high.u32 %v245
        %v248 = vmul.u32 %v241, %v232
        %v249 = vadd.s32 %v244, %v246
        %vm250 = vc.u32 %v244, %v246
        %v251 = vadd.s32 %v247, 1
        %v252 = vsel %vm250, %v251, %v247
        %v253 = vadd.s32 %v248, %v252
        %v254 = vadd.s32 %v253, 536870912
        %v255 = vshrl.u32 %v254, 30
        %v256 = vshll.u32 %v255, 30
        %v257 = vsub.s32 %v253, %v256
        %vm258 = vcmp.lt.s32.totalorder %v257, 0
        %v259 = vsub.s32 0, %v257
        %v260 = vsel %vm258, %v259, %v257
        %v261 = vclz %v260
        %v262 = vsub.s32 %v261, 2
        %vm263 = vcmp.gt.s32.totalorder 0, %v262
        %v264 = vsel %vm263, 0, %v262
        %v265 = vsub.s32 32, %v264
        %v266 = vshll.u32 %v257, %v264
        %v267 = vshrl.u32 %v249, %v265
        %v268 = vor.u32 %v266, %v267
        %v269 = vsub.s32 4294967266, %v264
        %v270 = vadd.s32 %v269, 127
        %v271 = vshll.u32 %v270, 23
        %v272 = vor.u32 4788187, %v271
        %v273 = vand.u32 2147483647, %v272
        %v275 = vcvt.s32.f32 %v268
        %v276 = vmul.f32 %v275, %v273
        %v277 = vxor.u32 %v276, 2147483648
        %v278 = vsel %vm195, %v277, %v276
        %v279 = vsub.s32 4, %v255
        %v280 = vsel %vm195, %v279, %v255
        %v281 = vsel %vm194, %v185, %v278
        %v282 = vsel %vm194, 0, %v280
        %v283 = vcosq.f32.pop %v281
        %v284 = vsinq.f32.pop %v281
        %vm285 = vweird.f32 %v185
        %v286 = vand.u32 %v282, 3
        %vm287 = vcmp.lt.s32.totalorder %v286, 2
        %vm288 = vcmp.eq.s32.totalorder %v286, 0
        %v289 = vxor.u32 %v284, 2147483648
        %v290 = vsel %vm288, %v283, %v289
        %vm291 = vcmp.eq.s32.totalorder %v286, 2
        %v292 = vxor.u32 %v283, 2147483648
        %v293 = vsel %vm291, %v292, %v284
        %v294 = vsel %vm287, %v290, %v293
        %v295 = vsel %vm285, nan, %v294
        %v296 = vand.u32 2147483647, %v186
        %vm297 = vcmp.le.f32.partialorder %v296, 0.7853982
        %vm298 = vcmp.lt.s32.totalorder %v186, 0
        %v299 = vand.u32 %v186, 2139095040
        %v300 = vshrl.u32 %v299, 23
        %v301 = vsub.s32 %v300, 127
        %v302 = vand.u32 2147483647, %v186
        %v303 = vand.u32 %v302, 8388607
        %v304 = vor.u32 %v303, 8388608
        %v305 = vsub.s32 0, %v304
        %v306 = vadd.s32 %v301, 1
        %vm307 = vcmp.gt.s32.totalorder %v306, 0
        %v308 = vsel %vm307, %v306, 0
        %v309 = vshrl.u32 %v308, 5
        %v310 = vand.u32 %v308, 31
        %v311 = vsub.s32 32, %v310
        %v312 = vshrl.u32 683565275, %v311
        %v313 = vshll.u32 683565275, %v310
        %v314 = vshrl.u32 2475754826, %v311
        %v315 = vor.u32 %v313, %v314
        %v316 = vshll.u32 2475754826, %v310
        %v317 = vshrl.u32 2131351028, %v311
        %v318 = vor.u32 %v316, %v317
        %v319 = vshll.u32 2131351028, %v310
        %v320 = vshrl.u32 2102212464, %v311
        %v321 = vor.u32 %v319, %v320
        %v322 = vshll.u32 2102212464, %v310
        %v323 = vshrl.u32 920167782, %v311
        %v324 = vor.u32 %v322, %v323
        %v325 = vshll.u32 920167782, %v310
        %v326 = vshrl.u32 1326507024, %v311
        %v327 = vor.u32 %v325, %v326
        %vm328 = vcmp.lt.s32.totalorder %v309, 1
        %vm329 = vcmp.lt.s32.totalorder %v309, 2
        %vm330 = vcmp.lt.s32.totalorder %v309, 3
        %vm331 = vcmp.lt.s32.totalorder %v309, 4
        %v332 = vsel %vm328, %v312, %v315
        %v333 = vsel %vm331, %v321, 2102212464
        %v334 = vsel %vm330, %v318, %v333
        %v335 = vsel %vm329, %v332, %v334
        %v336 = vsel %vm328, %v315, %v318
        %v337 = vsel %vm331, %v324, 920167782
        %v338 = vsel %vm330, %v321, %v337
        %v339 = vsel %vm329, %v336, %v338
        %v340 = vsel %vm328, %v318, %v321
        %v341 = vsel %vm331, %v327, 1326507024
        %v342 = vsel %vm330, %v324, %v341
        %v343 = vsel %vm329, %v340, %v342
        %v344 = vshll.u32 %v304, 8
        %v345 = vmul.u32.u64.compose %v344, %v343
        %v346 = vextract.low.u32 %v345
        %v347 = vextract.high.u32 %v345
        %v348 = vmul.u32.u64.compose %v344, %v339
        %v349 = vextract.low.u32 %v348
        %v350 = vextract.high.u32 %v348
        %v351 = vmul.u32 %v344, %v335
        %v352 = vadd.s32 %v347, %v349
        %vm353 = vc.u32 %v347, %v349
        %v354 = vadd.s32 %v350, 1
        %v355 = vsel %vm353, %v354, %v350
        %v356 = vadd.s32 %v351, %v355
        %v357 = vadd.s32 %v356, 536870912
        %v358 = vshrl.u32 %v357, 30
        %v359 = vshll.u32 %v358, 30
        %v360 = vsub.s32 %v356, %v359
        %vm361 = vcmp.lt.s32.totalorder %v360, 0
        %v362 = vsub.s32 0, %v360
        %v363 = vsel %vm361, %v362, %v360
        %v364 = vclz %v363
        %v365 = vsub.s32 %v364, 2
        %vm366 = vcmp.gt.s32.totalorder 0, %v365
        %v367 = vsel %vm366, 0, %v365
        %v368 = vsub.s32 32, %v367
        %v369 = vshll.u32 %v360, %v367
        %v370 = vshrl.u32 %v352, %v368
        %v371 = vor.u32 %v369, %v370
        %v372 = vsub.s32 4294967266, %v367
        %v373 = vadd.s32 %v372, 127
        %v374 = vshll.u32 %v373, 23
        %v375 = vor.u32 4788187, %v374
        %v376 = vand.u32 2147483647, %v375
        %v378 = vcvt.s32.f32 %v371
        %v379 = vmul.f32 %v378, %v376
        %v380 = vxor.u32 %v379, 2147483648
        %v381 = vsel %vm298, %v380, %v379
        %v382 = vsub.s32 4, %v358
        %v383 = vsel %vm298, %v382, %v358
        %v384 = vsel %vm297, %v186, %v381
        %v385 = vsel %vm297, 0, %v383
        %v386 = vcosq.f32.pop %v384
        %v387 = vsinq.f32.pop %v384
        %vm388 = vweird.f32 %v186
        %v389 = vand.u32 %v385, 3
        %vm390 = vcmp.lt.s32.totalorder %v389, 2
        %vm391 = vcmp.eq.s32.totalorder %v389, 0
        %v392 = vxor.u32 %v387, 2147483648
        %v393 = vsel %vm391, %v386, %v392
        %vm394 = vcmp.eq.s32.totalorder %v389, 2
        %v395 = vxor.u32 %v386, 2147483648
        %v396 = vsel %vm394, %v395, %v387
        %v397 = vsel %vm390, %v393, %v396
        %v398 = vsel %vm388, nan, %v397
        %v399 = vand.u32 2147483647, %v187
        %vm400 = vcmp.le.f32.partialorder %v399, 0.7853982
        %vm401 = vcmp.lt.s32.totalorder %v187, 0
        %v402 = vand.u32 %v187, 2139095040
        %v403 = vshrl.u32 %v402, 23
        %v404 = vsub.s32 %v403, 127
        %v405 = vand.u32 2147483647, %v187
        %v406 = vand.u32 %v405, 8388607
        %v407 = vor.u32 %v406, 8388608
        %v408 = vsub.s32 0, %v407
        %v409 = vadd.s32 %v404, 1
        %vm410 = vcmp.gt.s32.totalorder %v409, 0
        %v411 = vsel %vm410, %v409, 0
        %v412 = vshrl.u32 %v411, 5
        %v413 = vand.u32 %v411, 31
        %v414 = vsub.s32 32, %v413
        %v415 = vshrl.u32 683565275, %v414
        %v416 = vshll.u32 683565275, %v413
        %v417 = vshrl.u32 2475754826, %v414
        %v418 = vor.u32 %v416, %v417
        %v419 = vshll.u32 2475754826, %v413
        %v420 = vshrl.u32 2131351028, %v414
        %v421 = vor.u32 %v419, %v420
        %v422 = vshll.u32 2131351028, %v413
        %v423 = vshrl.u32 2102212464, %v414
        %v424 = vor.u32 %v422, %v423
        %v425 = vshll.u32 2102212464, %v413
        %v426 = vshrl.u32 920167782, %v414
        %v427 = vor.u32 %v425, %v426
        %v428 = vshll.u32 920167782, %v413
        %v429 = vshrl.u32 1326507024, %v414
        %v430 = vor.u32 %v428, %v429
        %vm431 = vcmp.lt.s32.totalorder %v412, 1
        %vm432 = vcmp.lt.s32.totalorder %v412, 2
        %vm433 = vcmp.lt.s32.totalorder %v412, 3
        %vm434 = vcmp.lt.s32.totalorder %v412, 4
        %v435 = vsel %vm431, %v415, %v418
        %v436 = vsel %vm434, %v424, 2102212464
        %v437 = vsel %vm433, %v421, %v436
        %v438 = vsel %vm432, %v435, %v437
        %v439 = vsel %vm431, %v418, %v421
        %v440 = vsel %vm434, %v427, 920167782
        %v441 = vsel %vm433, %v424, %v440
        %v442 = vsel %vm432, %v439, %v441
        %v443 = vsel %vm431, %v421, %v424
        %v444 = vsel %vm434, %v430, 1326507024
        %v445 = vsel %vm433, %v427, %v444
        %v446 = vsel %vm432, %v443, %v445
        %v447 = vshll.u32 %v407, 8
        %v448 = vmul.u32.u64.compose %v447, %v446
        %v449 = vextract.low.u32 %v448
        %v450 = vextract.high.u32 %v448
        %v451 = vmul.u32.u64.compose %v447, %v442
        %v452 = vextract.low.u32 %v451
        %v453 = vextract.high.u32 %v451
        %v454 = vmul.u32 %v447, %v438
        %v455 = vadd.s32 %v450, %v452
        %vm456 = vc.u32 %v450, %v452
        %v457 = vadd.s32 %v453, 1
        %v458 = vsel %vm456, %v457, %v453
        %v459 = vadd.s32 %v454, %v458
        %v460 = vadd.s32 %v459, 536870912
        %v461 = vshrl.u32 %v460, 30
        %v462 = vshll.u32 %v461, 30
        %v463 = vsub.s32 %v459, %v462
        %vm464 = vcmp.lt.s32.totalorder %v463, 0
        %v465 = vsub.s32 0, %v463
        %v466 = vsel %vm464, %v465, %v463
        %v467 = vclz %v466
        %v468 = vsub.s32 %v467, 2
        %vm469 = vcmp.gt.s32.totalorder 0, %v468
        %v470 = vsel %vm469, 0, %v468
        %v471 = vsub.s32 32, %v470
        %v472 = vshll.u32 %v463, %v470
        %v473 = vshrl.u32 %v455, %v471
        %v474 = vor.u32 %v472, %v473
        %v475 = vsub.s32 4294967266, %v470
        %v476 = vadd.s32 %v475, 127
        %v477 = vshll.u32 %v476, 23
        %v478 = vor.u32 4788187, %v477
        %v479 = vand.u32 2147483647, %v478
        %v481 = vcvt.s32.f32 %v474
        %v482 = vmul.f32 %v481, %v479
        %v483 = vxor.u32 %v482, 2147483648
        %v484 = vsel %vm401, %v483, %v482
        %v485 = vsub.s32 4, %v461
        %v486 = vsel %vm401, %v485, %v461
        %v487 = vsel %vm400, %v187, %v484
        %v488 = vsel %vm400, 0, %v486
        %v489 = vcosq.f32.pop %v487
        %v490 = vsinq.f32.pop %v487
        %vm491 = vweird.f32 %v187
        %v492 = vand.u32 %v488, 3
        %vm493 = vcmp.lt.s32.totalorder %v492, 2
        %vm494 = vcmp.eq.s32.totalorder %v492, 0
        %v495 = vxor.u32 %v490, 2147483648
        %v496 = vsel %vm494, %v489, %v495
        %vm497 = vcmp.eq.s32.totalorder %v492, 2
        %v498 = vxor.u32 %v489, 2147483648
        %v499 = vsel %vm497, %v498, %v490
        %v500 = vsel %vm493, %v496, %v499
        %v501 = vsel %vm491, nan, %v500
        %v502 = vand.u32 2147483647, %v188
        %vm503 = vcmp.le.f32.partialorder %v502, 0.7853982
        %vm504 = vcmp.lt.s32.totalorder %v188, 0
        %v505 = vand.u32 %v188, 2139095040
        %v506 = vshrl.u32 %v505, 23
        %v507 = vsub.s32 %v506, 127
        %v508 = vand.u32 2147483647, %v188
        %v509 = vand.u32 %v508, 8388607
        %v510 = vor.u32 %v509, 8388608
        %v511 = vsub.s32 0, %v510
        %v512 = vadd.s32 %v507, 1
        %vm513 = vcmp.gt.s32.totalorder %v512, 0
        %v514 = vsel %vm513, %v512, 0
        %v515 = vshrl.u32 %v514, 5
        %v516 = vand.u32 %v514, 31
        %v517 = vsub.s32 32, %v516
        %v518 = vshrl.u32 683565275, %v517
        %v519 = vshll.u32 683565275, %v516
        %v520 = vshrl.u32 2475754826, %v517
        %v521 = vor.u32 %v519, %v520
        %v522 = vshll.u32 2475754826, %v516
        %v523 = vshrl.u32 2131351028, %v517
        %v524 = vor.u32 %v522, %v523
        %v525 = vshll.u32 2131351028, %v516
        %v526 = vshrl.u32 2102212464, %v517
        %v527 = vor.u32 %v525, %v526
        %v528 = vshll.u32 2102212464, %v516
        %v529 = vshrl.u32 920167782, %v517
        %v530 = vor.u32 %v528, %v529
        %v531 = vshll.u32 920167782, %v516
        %v532 = vshrl.u32 1326507024, %v517
        %v533 = vor.u32 %v531, %v532
        %vm534 = vcmp.lt.s32.totalorder %v515, 1
        %vm535 = vcmp.lt.s32.totalorder %v515, 2
        %vm536 = vcmp.lt.s32.totalorder %v515, 3
        %vm537 = vcmp.lt.s32.totalorder %v515, 4
        %v538 = vsel %vm534, %v518, %v521
        %v539 = vsel %vm537, %v527, 2102212464
        %v540 = vsel %vm536, %v524, %v539
        %v541 = vsel %vm535, %v538, %v540
        %v542 = vsel %vm534, %v521, %v524
        %v543 = vsel %vm537, %v530, 920167782
        %v544 = vsel %vm536, %v527, %v543
        %v545 = vsel %vm535, %v542, %v544
        %v546 = vsel %vm534, %v524, %v527
        %v547 = vsel %vm537, %v533, 1326507024
        %v548 = vsel %vm536, %v530, %v547
        %v549 = vsel %vm535, %v546, %v548
        %v550 = vshll.u32 %v510, 8
        %v551 = vmul.u32.u64.compose %v550, %v549
        %v552 = vextract.low.u32 %v551
        %v553 = vextract.high.u32 %v551
        %v554 = vmul.u32.u64.compose %v550, %v545
        %v555 = vextract.low.u32 %v554
        %v556 = vextract.high.u32 %v554
        %v557 = vmul.u32 %v550, %v541
        %v558 = vadd.s32 %v553, %v555
        %vm559 = vc.u32 %v553, %v555
        %v560 = vadd.s32 %v556, 1
        %v561 = vsel %vm559, %v560, %v556
        %v562 = vadd.s32 %v557, %v561
        %v563 = vadd.s32 %v562, 536870912
        %v564 = vshrl.u32 %v563, 30
        %v565 = vshll.u32 %v564, 30
        %v566 = vsub.s32 %v562, %v565
        %vm567 = vcmp.lt.s32.totalorder %v566, 0
        %v568 = vsub.s32 0, %v566
        %v569 = vsel %vm567, %v568, %v566
        %v570 = vclz %v569
        %v571 = vsub.s32 %v570, 2
        %vm572 = vcmp.gt.s32.totalorder 0, %v571
        %v573 = vsel %vm572, 0, %v571
        %v574 = vsub.s32 32, %v573
        %v575 = vshll.u32 %v566, %v573
        %v576 = vshrl.u32 %v558, %v574
        %v577 = vor.u32 %v575, %v576
        %v578 = vsub.s32 4294967266, %v573
        %v579 = vadd.s32 %v578, 127
        %v580 = vshll.u32 %v579, 23
        %v581 = vor.u32 4788187, %v580
        %v582 = vand.u32 2147483647, %v581
        %v584 = vcvt.s32.f32 %v577
        %v585 = vmul.f32 %v584, %v582
        %v586 = vxor.u32 %v585, 2147483648
        %v587 = vsel %vm504, %v586, %v585
        %v588 = vsub.s32 4, %v564
        %v589 = vsel %vm504, %v588, %v564
        %v590 = vsel %vm503, %v188, %v587
        %v591 = vsel %vm503, 0, %v589
        %v592 = vcosq.f32.pop %v590
        %v593 = vsinq.f32.pop %v590
        %vm594 = vweird.f32 %v188
        %v595 = vand.u32 %v591, 3
        %vm596 = vcmp.lt.s32.totalorder %v595, 2
        %vm597 = vcmp.eq.s32.totalorder %v595, 0
        %v598 = vxor.u32 %v593, 2147483648
        %v599 = vsel %vm597, %v592, %v598
        %vm600 = vcmp.eq.s32.totalorder %v595, 2
        %v601 = vxor.u32 %v592, 2147483648
        %v602 = vsel %vm600, %v601, %v593
        %v603 = vsel %vm596, %v599, %v602
        %v604 = vsel %vm594, nan, %v603
        %v605 = vand.u32 2147483647, %v189
        %vm606 = vcmp.le.f32.partialorder %v605, 0.7853982
        %vm607 = vcmp.lt.s32.totalorder %v189, 0
        %v608 = vand.u32 %v189, 2139095040
        %v609 = vshrl.u32 %v608, 23
        %v610 = vsub.s32 %v609, 127
        %v611 = vand.u32 2147483647, %v189
        %v612 = vand.u32 %v611, 8388607
        %v613 = vor.u32 %v612, 8388608
        %v614 = vsub.s32 0, %v613
        %v615 = vadd.s32 %v610, 1
        %vm616 = vcmp.gt.s32.totalorder %v615, 0
        %v617 = vsel %vm616, %v615, 0
        %v618 = vshrl.u32 %v617, 5
        %v619 = vand.u32 %v617, 31
        %v620 = vsub.s32 32, %v619
        %v621 = vshrl.u32 683565275, %v620
        %v622 = vshll.u32 683565275, %v619
        %v623 = vshrl.u32 2475754826, %v620
        %v624 = vor.u32 %v622, %v623
        %v625 = vshll.u32 2475754826, %v619
        %v626 = vshrl.u32 2131351028, %v620
        %v627 = vor.u32 %v625, %v626
        %v628 = vshll.u32 2131351028, %v619
        %v629 = vshrl.u32 2102212464, %v620
        %v630 = vor.u32 %v628, %v629
        %v631 = vshll.u32 2102212464, %v619
        %v632 = vshrl.u32 920167782, %v620
        %v633 = vor.u32 %v631, %v632
        %v634 = vshll.u32 920167782, %v619
        %v635 = vshrl.u32 1326507024, %v620
        %v636 = vor.u32 %v634, %v635
        %vm637 = vcmp.lt.s32.totalorder %v618, 1
        %vm638 = vcmp.lt.s32.totalorder %v618, 2
        %vm639 = vcmp.lt.s32.totalorder %v618, 3
        %vm640 = vcmp.lt.s32.totalorder %v618, 4
        %v641 = vsel %vm637, %v621, %v624
        %v642 = vsel %vm640, %v630, 2102212464
        %v643 = vsel %vm639, %v627, %v642
        %v644 = vsel %vm638, %v641, %v643
        %v645 = vsel %vm637, %v624, %v627
        %v646 = vsel %vm640, %v633, 920167782
        %v647 = vsel %vm639, %v630, %v646
        %v648 = vsel %vm638, %v645, %v647
        %v649 = vsel %vm637, %v627, %v630
        %v650 = vsel %vm640, %v636, 1326507024
        %v651 = vsel %vm639, %v633, %v650
        %v652 = vsel %vm638, %v649, %v651
        %v653 = vshll.u32 %v613, 8
        %v654 = vmul.u32.u64.compose %v653, %v652
        %v655 = vextract.low.u32 %v654
        %v656 = vextract.high.u32 %v654
        %v657 = vmul.u32.u64.compose %v653, %v648
        %v658 = vextract.low.u32 %v657
        %v659 = vextract.high.u32 %v657
        %v660 = vmul.u32 %v653, %v644
        %v661 = vadd.s32 %v656, %v658
        %vm662 = vc.u32 %v656, %v658
        %v663 = vadd.s32 %v659, 1
        %v664 = vsel %vm662, %v663, %v659
        %v665 = vadd.s32 %v660, %v664
        %v666 = vadd.s32 %v665, 536870912
        %v667 = vshrl.u32 %v666, 30
        %v668 = vshll.u32 %v667, 30
        %v669 = vsub.s32 %v665, %v668
        %vm670 = vcmp.lt.s32.totalorder %v669, 0
        %v671 = vsub.s32 0, %v669
        %v672 = vsel %vm670, %v671, %v669
        %v673 = vclz %v672
        %v674 = vsub.s32 %v673, 2
        %vm675 = vcmp.gt.s32.totalorder 0, %v674
        %v676 = vsel %vm675, 0, %v674
        %v677 = vsub.s32 32, %v676
        %v678 = vshll.u32 %v669, %v676
        %v679 = vshrl.u32 %v661, %v677
        %v680 = vor.u32 %v678, %v679
        %v681 = vsub.s32 4294967266, %v676
        %v682 = vadd.s32 %v681, 127
        %v683 = vshll.u32 %v682, 23
        %v684 = vor.u32 4788187, %v683
        %v685 = vand.u32 2147483647, %v684
        %v687 = vcvt.s32.f32 %v680
        %v688 = vmul.f32 %v687, %v685
        %v689 = vxor.u32 %v688, 2147483648
        %v690 = vsel %vm607, %v689, %v688
        %v691 = vsub.s32 4, %v667
        %v692 = vsel %vm607, %v691, %v667
        %v693 = vsel %vm606, %v189, %v690
        %v694 = vsel %vm606, 0, %v692
        %v695 = vcosq.f32.pop %v693
        %v696 = vsinq.f32.pop %v693
        %vm697 = vweird.f32 %v189
        %v698 = vand.u32 %v694, 3
        %vm699 = vcmp.lt.s32.totalorder %v698, 2
        %vm700 = vcmp.eq.s32.totalorder %v698, 0
        %v701 = vxor.u32 %v696, 2147483648
        %v702 = vsel %vm700, %v695, %v701
        %vm703 = vcmp.eq.s32.totalorder %v698, 2
        %v704 = vxor.u32 %v695, 2147483648
        %v705 = vsel %vm703, %v704, %v696
        %v706 = vsel %vm699, %v702, %v705
        %v707 = vsel %vm697, nan, %v706
        %v708 = vand.u32 2147483647, %v190
        %vm709 = vcmp.le.f32.partialorder %v708, 0.7853982
        %vm710 = vcmp.lt.s32.totalorder %v190, 0
        %v711 = vand.u32 %v190, 2139095040
        %v712 = vshrl.u32 %v711, 23
        %v713 = vsub.s32 %v712, 127
        %v714 = vand.u32 2147483647, %v190
        %v715 = vand.u32 %v714, 8388607
        %v716 = vor.u32 %v715, 8388608
        %v717 = vsub.s32 0, %v716
        %v718 = vadd.s32 %v713, 1
        %vm719 = vcmp.gt.s32.totalorder %v718, 0
        %v720 = vsel %vm719, %v718, 0
        %v721 = vshrl.u32 %v720, 5
        %v722 = vand.u32 %v720, 31
        %v723 = vsub.s32 32, %v722
        %v724 = vshrl.u32 683565275, %v723
        %v725 = vshll.u32 683565275, %v722
        %v726 = vshrl.u32 2475754826, %v723
        %v727 = vor.u32 %v725, %v726
        %v728 = vshll.u32 2475754826, %v722
        %v729 = vshrl.u32 2131351028, %v723
        %v730 = vor.u32 %v728, %v729
        %v731 = vshll.u32 2131351028, %v722
        %v732 = vshrl.u32 2102212464, %v723
        %v733 = vor.u32 %v731, %v732
        %v734 = vshll.u32 2102212464, %v722
        %v735 = vshrl.u32 920167782, %v723
        %v736 = vor.u32 %v734, %v735
        %v737 = vshll.u32 920167782, %v722
        %v738 = vshrl.u32 1326507024, %v723
        %v739 = vor.u32 %v737, %v738
        %vm740 = vcmp.lt.s32.totalorder %v721, 1
        %vm741 = vcmp.lt.s32.totalorder %v721, 2
        %vm742 = vcmp.lt.s32.totalorder %v721, 3
        %vm743 = vcmp.lt.s32.totalorder %v721, 4
        %v744 = vsel %vm740, %v724, %v727
        %v745 = vsel %vm743, %v733, 2102212464
        %v746 = vsel %vm742, %v730, %v745
        %v747 = vsel %vm741, %v744, %v746
        %v748 = vsel %vm740, %v727, %v730
        %v749 = vsel %vm743, %v736, 920167782
        %v750 = vsel %vm742, %v733, %v749
        %v751 = vsel %vm741, %v748, %v750
        %v752 = vsel %vm740, %v730, %v733
        %v753 = vsel %vm743, %v739, 1326507024
        %v754 = vsel %vm742, %v736, %v753
        %v755 = vsel %vm741, %v752, %v754
        %v756 = vshll.u32 %v716, 8
        %v757 = vmul.u32.u64.compose %v756, %v755
        %v758 = vextract.low.u32 %v757
        %v759 = vextract.high.u32 %v757
        %v760 = vmul.u32.u64.compose %v756, %v751
        %v761 = vextract.low.u32 %v760
        %v762 = vextract.high.u32 %v760
        %v763 = vmul.u32 %v756, %v747
        %v764 = vadd.s32 %v759, %v761
        %vm765 = vc.u32 %v759, %v761
        %v766 = vadd.s32 %v762, 1
        %v767 = vsel %vm765, %v766, %v762
        %v768 = vadd.s32 %v763, %v767
        %v769 = vadd.s32 %v768, 536870912
        %v770 = vshrl.u32 %v769, 30
        %v771 = vshll.u32 %v770, 30
        %v772 = vsub.s32 %v768, %v771
        %vm773 = vcmp.lt.s32.totalorder %v772, 0
        %v774 = vsub.s32 0, %v772
        %v775 = vsel %vm773, %v774, %v772
        %v776 = vclz %v775
        %v777 = vsub.s32 %v776, 2
        %vm778 = vcmp.gt.s32.totalorder 0, %v777
        %v779 = vsel %vm778, 0, %v777
        %v780 = vsub.s32 32, %v779
        %v781 = vshll.u32 %v772, %v779
        %v782 = vshrl.u32 %v764, %v780
        %v783 = vor.u32 %v781, %v782
        %v784 = vsub.s32 4294967266, %v779
        %v785 = vadd.s32 %v784, 127
        %v786 = vshll.u32 %v785, 23
        %v787 = vor.u32 4788187, %v786
        %v788 = vand.u32 2147483647, %v787
        %v790 = vcvt.s32.f32 %v783
        %v791 = vmul.f32 %v790, %v788
        %v792 = vxor.u32 %v791, 2147483648
        %v793 = vsel %vm710, %v792, %v791
        %v794 = vsub.s32 4, %v770
        %v795 = vsel %vm710, %v794, %v770
        %v796 = vsel %vm709, %v190, %v793
        %v797 = vsel %vm709, 0, %v795
        %v798 = vcosq.f32.pop %v796
        %v799 = vsinq.f32.pop %v796
        %vm800 = vweird.f32 %v190
        %v801 = vand.u32 %v797, 3
        %vm802 = vcmp.lt.s32.totalorder %v801, 2
        %vm803 = vcmp.eq.s32.totalorder %v801, 0
        %v804 = vxor.u32 %v799, 2147483648
        %v805 = vsel %vm803, %v798, %v804
        %vm806 = vcmp.eq.s32.totalorder %v801, 2
        %v807 = vxor.u32 %v798, 2147483648
        %v808 = vsel %vm806, %v807, %v799
        %v809 = vsel %vm802, %v805, %v808
        %v810 = vsel %vm800, nan, %v809
        %v811 = vand.u32 2147483647, %v191
        %vm812 = vcmp.le.f32.partialorder %v811, 0.7853982
        %vm813 = vcmp.lt.s32.totalorder %v191, 0
        %v814 = vand.u32 %v191, 2139095040
        %v815 = vshrl.u32 %v814, 23
        %v816 = vsub.s32 %v815, 127
        %v817 = vand.u32 2147483647, %v191
        %v818 = vand.u32 %v817, 8388607
        %v819 = vor.u32 %v818, 8388608
        %v820 = vsub.s32 0, %v819
        %v821 = vadd.s32 %v816, 1
        %vm822 = vcmp.gt.s32.totalorder %v821, 0
        %v823 = vsel %vm822, %v821, 0
        %v824 = vshrl.u32 %v823, 5
        %v825 = vand.u32 %v823, 31
        %v826 = vsub.s32 32, %v825
        %v827 = vshrl.u32 683565275, %v826
        %v828 = vshll.u32 683565275, %v825
        %v829 = vshrl.u32 2475754826, %v826
        %v830 = vor.u32 %v828, %v829
        %v831 = vshll.u32 2475754826, %v825
        %v832 = vshrl.u32 2131351028, %v826
        %v833 = vor.u32 %v831, %v832
        %v834 = vshll.u32 2131351028, %v825
        %v835 = vshrl.u32 2102212464, %v826
        %v836 = vor.u32 %v834, %v835
        %v837 = vshll.u32 2102212464, %v825
        %v838 = vshrl.u32 920167782, %v826
        %v839 = vor.u32 %v837, %v838
        %v840 = vshll.u32 920167782, %v825
        %v841 = vshrl.u32 1326507024, %v826
        %v842 = vor.u32 %v840, %v841
        %vm843 = vcmp.lt.s32.totalorder %v824, 1
        %vm844 = vcmp.lt.s32.totalorder %v824, 2
        %vm845 = vcmp.lt.s32.totalorder %v824, 3
        %vm846 = vcmp.lt.s32.totalorder %v824, 4
        %v847 = vsel %vm843, %v827, %v830
        %v848 = vsel %vm846, %v836, 2102212464
        %v849 = vsel %vm845, %v833, %v848
        %v850 = vsel %vm844, %v847, %v849
        %v851 = vsel %vm843, %v830, %v833
        %v852 = vsel %vm846, %v839, 920167782
        %v853 = vsel %vm845, %v836, %v852
        %v854 = vsel %vm844, %v851, %v853
        %v855 = vsel %vm843, %v833, %v836
        %v856 = vsel %vm846, %v842, 1326507024
        %v857 = vsel %vm845, %v839, %v856
        %v858 = vsel %vm844, %v855, %v857
        %v859 = vshll.u32 %v819, 8
        %v860 = vmul.u32.u64.compose %v859, %v858
        %v861 = vextract.low.u32 %v860
        %v862 = vextract.high.u32 %v860
        %v863 = vmul.u32.u64.compose %v859, %v854
        %v864 = vextract.low.u32 %v863
        %v865 = vextract.high.u32 %v863
        %v866 = vmul.u32 %v859, %v850
        %v867 = vadd.s32 %v862, %v864
        %vm868 = vc.u32 %v862, %v864
        %v869 = vadd.s32 %v865, 1
        %v870 = vsel %vm868, %v869, %v865
        %v871 = vadd.s32 %v866, %v870
        %v872 = vadd.s32 %v871, 536870912
        %v873 = vshrl.u32 %v872, 30
        %v874 = vshll.u32 %v873, 30
        %v875 = vsub.s32 %v871, %v874
        %vm876 = vcmp.lt.s32.totalorder %v875, 0
        %v877 = vsub.s32 0, %v875
        %v878 = vsel %vm876, %v877, %v875
        %v879 = vclz %v878
        %v880 = vsub.s32 %v879, 2
        %vm881 = vcmp.gt.s32.totalorder 0, %v880
        %v882 = vsel %vm881, 0, %v880
        %v883 = vsub.s32 32, %v882
        %v884 = vshll.u32 %v875, %v882
        %v885 = vshrl.u32 %v867, %v883
        %v886 = vor.u32 %v884, %v885
        %v887 = vsub.s32 4294967266, %v882
        %v888 = vadd.s32 %v887, 127
        %v889 = vshll.u32 %v888, 23
        %v890 = vor.u32 4788187, %v889
        %v891 = vand.u32 2147483647, %v890
        %v893 = vcvt.s32.f32 %v886
        %v894 = vmul.f32 %v893, %v891
        %v895 = vxor.u32 %v894, 2147483648
        %v896 = vsel %vm813, %v895, %v894
        %v897 = vsub.s32 4, %v873
        %v898 = vsel %vm813, %v897, %v873
        %v899 = vsel %vm812, %v191, %v896
        %v900 = vsel %vm812, 0, %v898
        %v901 = vcosq.f32.pop %v899
        %v902 = vsinq.f32.pop %v899
        %vm903 = vweird.f32 %v191
        %v904 = vand.u32 %v900, 3
        %vm905 = vcmp.lt.s32.totalorder %v904, 2
        %vm906 = vcmp.eq.s32.totalorder %v904, 0
        %v907 = vxor.u32 %v902, 2147483648
        %v908 = vsel %vm906, %v901, %v907
        %vm909 = vcmp.eq.s32.totalorder %v904, 2
        %v910 = vxor.u32 %v901, 2147483648
        %v911 = vsel %vm909, %v910, %v902
        %v912 = vsel %vm905, %v908, %v911
        %v913 = vsel %vm903, nan, %v912
        %v914 = vand.u32 2147483647, %v192
        %vm915 = vcmp.le.f32.partialorder %v914, 0.7853982
        %vm916 = vcmp.lt.s32.totalorder %v192, 0
        %v917 = vand.u32 %v192, 2139095040
        %v918 = vshrl.u32 %v917, 23
        %v919 = vsub.s32 %v918, 127
        %v920 = vand.u32 2147483647, %v192
        %v921 = vand.u32 %v920, 8388607
        %v922 = vor.u32 %v921, 8388608
        %v923 = vsub.s32 0, %v922
        %v924 = vadd.s32 %v919, 1
        %vm925 = vcmp.gt.s32.totalorder %v924, 0
        %v926 = vsel %vm925, %v924, 0
        %v927 = vshrl.u32 %v926, 5
        %v928 = vand.u32 %v926, 31
        %v929 = vsub.s32 32, %v928
        %v930 = vshrl.u32 683565275, %v929
        %v931 = vshll.u32 683565275, %v928
        %v932 = vshrl.u32 2475754826, %v929
        %v933 = vor.u32 %v931, %v932
        %v934 = vshll.u32 2475754826, %v928
        %v935 = vshrl.u32 2131351028, %v929
        %v936 = vor.u32 %v934, %v935
        %v937 = vshll.u32 2131351028, %v928
        %v938 = vshrl.u32 2102212464, %v929
        %v939 = vor.u32 %v937, %v938
        %v940 = vshll.u32 2102212464, %v928
        %v941 = vshrl.u32 920167782, %v929
        %v942 = vor.u32 %v940, %v941
        %v943 = vshll.u32 920167782, %v928
        %v944 = vshrl.u32 1326507024, %v929
        %v945 = vor.u32 %v943, %v944
        %vm946 = vcmp.lt.s32.totalorder %v927, 1
        %vm947 = vcmp.lt.s32.totalorder %v927, 2
        %vm948 = vcmp.lt.s32.totalorder %v927, 3
        %vm949 = vcmp.lt.s32.totalorder %v927, 4
        %v950 = vsel %vm946, %v930, %v933
        %v951 = vsel %vm949, %v939, 2102212464
        %v952 = vsel %vm948, %v936, %v951
        %v953 = vsel %vm947, %v950, %v952
        %v954 = vsel %vm946, %v933, %v936
        %v955 = vsel %vm949, %v942, 920167782
        %v956 = vsel %vm948, %v939, %v955
        %v957 = vsel %vm947, %v954, %v956
        %v958 = vsel %vm946, %v936, %v939
        %v959 = vsel %vm949, %v945, 1326507024
        %v960 = vsel %vm948, %v942, %v959
        %v961 = vsel %vm947, %v958, %v960
        %v962 = vshll.u32 %v922, 8
        %v963 = vmul.u32.u64.compose %v962, %v961
        %v964 = vextract.low.u32 %v963
        %v965 = vextract.high.u32 %v963
        %v966 = vmul.u32.u64.compose %v962, %v957
        %v967 = vextract.low.u32 %v966
        %v968 = vextract.high.u32 %v966
        %v969 = vmul.u32 %v962, %v953
        %v970 = vadd.s32 %v965, %v967
        %vm971 = vc.u32 %v965, %v967
        %v972 = vadd.s32 %v968, 1
        %v973 = vsel %vm971, %v972, %v968
        %v974 = vadd.s32 %v969, %v973
        %v975 = vadd.s32 %v974, 536870912
        %v976 = vshrl.u32 %v975, 30
        %v977 = vshll.u32 %v976, 30
        %v978 = vsub.s32 %v974, %v977
        %vm979 = vcmp.lt.s32.totalorder %v978, 0
        %v980 = vsub.s32 0, %v978
        %v981 = vsel %vm979, %v980, %v978
        %v982 = vclz %v981
        %v983 = vsub.s32 %v982, 2
        %vm984 = vcmp.gt.s32.totalorder 0, %v983
        %v985 = vsel %vm984, 0, %v983
        %v986 = vsub.s32 32, %v985
        %v987 = vshll.u32 %v978, %v985
        %v988 = vshrl.u32 %v970, %v986
        %v989 = vor.u32 %v987, %v988
        %v990 = vsub.s32 4294967266, %v985
        %v991 = vadd.s32 %v990, 127
        %v992 = vshll.u32 %v991, 23
        %v993 = vor.u32 4788187, %v992
        %v994 = vand.u32 2147483647, %v993
        %v996 = vcvt.s32.f32 %v989
        %v997 = vmul.f32 %v996, %v994
        %v998 = vxor.u32 %v997, 2147483648
        %v999 = vsel %vm916, %v998, %v997
        %v1000 = vsub.s32 4, %v976
        %v1001 = vsel %vm916, %v1000, %v976
        %v1002 = vsel %vm915, %v192, %v999
        %v1003 = vsel %vm915, 0, %v1001
        %v1004 = vcosq.f32.pop %v1002
        %v1005 = vsinq.f32.pop %v1002
        %vm1006 = vweird.f32 %v192
        %v1007 = vand.u32 %v1003, 3
        %vm1008 = vcmp.lt.s32.totalorder %v1007, 2
        %vm1009 = vcmp.eq.s32.totalorder %v1007, 0
        %v1010 = vxor.u32 %v1005, 2147483648
        %v1011 = vsel %vm1009, %v1004, %v1010
        %vm1012 = vcmp.eq.s32.totalorder %v1007, 2
        %v1013 = vxor.u32 %v1004, 2147483648
        %v1014 = vsel %vm1012, %v1013, %v1005
        %v1015 = vsel %vm1008, %v1011, %v1014
        %v1016 = vsel %vm1006, nan, %v1015
        %1017 = vst [vmem:[%s134] sm:$0xff] %v295
        %1018 = vst [vmem:[%s134 + $0x8] sm:$0xff] %v398
        %1019 = vst [vmem:[%s134 + $0x10] sm:$0xff] %v501
        %1020 = vst [vmem:[%s134 + $0x18] sm:$0xff] %v604
        %1021 = vst [vmem:[%s134 + $0x20] sm:$0xff] %v707
        %1022 = vst [vmem:[%s134 + $0x28] sm:$0xff] %v810
        %1023 = vst [vmem:[%s134 + $0x30] sm:$0xff] %v913
        %1024 = vst [vmem:[%s134 + $0x38] sm:$0xff] %v1016
        %s1025 = sand.u32 %s67, 1
        %s1026 = scalar_lea.sflag [#allocation4], %s1025
        %s1027 = sand.u32 %s67, 1
        %s1028 = smul.addr %s1027, 64
        %s1029 = scalar_lea.vmem [#allocation5], %s1028
        // Predicated region
        $region33: #{tpu_custom_call.1} parent=27 // pred_check
          %p1030 = pneg %p77
        $region34: #{tpu_custom_call.1} parent=27 // pred_check_branch
          %1032 = sbr.rel (%p1030) target = $region36
        $region35: #{tpu_custom_call.1} parent=27 // pred_region
          %s1033 = smul.u32 8, %s17
          %s1035 = ssub.s32 1024, 1024
          %1036 = vsyncadd %s1026, %s1035
          %s1037 = smul.addr %s1033, 128
          %s1038 = scalar_lea.hbm %s2, %s1037
          %s1039 = sshll.u32 %s1029, 4
          %s1040 = int_to_ptr.vmem [resolvable:$true] %s1039
          %1045 = dma.vmem_to_hbm [thread:$0]  %s1040, 1024, %s1038, %s1026, 128, 128, 8
        $region36: #{tpu_custom_call.1} parent=27 // pred_fallthru
          _
      $region28: #{tpu_custom_call.1} parent=5 // pred_fallthru
        _
      %p1046 = scmp.le.s32.totalorder 2, %s12
      // Predicated region
      $region37: #{tpu_custom_call.1} parent=5 // pred_check
        %p1047 = pneg %p1046
      $region38: #{tpu_custom_call.1} parent=5 // pred_check_branch
        %1049 = sbr.rel (%p1047) target = $region40
      $region39: #{tpu_custom_call.1} parent=5 // pred_region
        %s1050 = ssub.s32 %s12, 2
        // Predicated region
        $region41: #{tpu_custom_call.1} parent=39 // pred_check
          %p1051 = pneg %p83
        $region42: #{tpu_custom_call.1} parent=39 // pred_check_branch
          %1053 = sbr.rel (%p1051) target = $region44
        $region43: #{tpu_custom_call.1} parent=39 // pred_region
          %s1054 = sand.u32 %s68, 1
          %s1055 = scalar_lea.sflag [#allocation4], %s1054
          %s1056 = sand.u32 %s68, 1
          %s1057 = smul.addr %s1056, 64
          %s1058 = scalar_lea.vmem [#allocation5], %s1057
          %1059 = dma.done %s1055, 1024
        $region44: #{tpu_custom_call.1} parent=39 // pred_fallthru
          _
      $region40: #{tpu_custom_call.1} parent=5 // pred_fallthru
        _
    $region6: #{tpu_custom_call.1} parent=1 // loop_footer
      %s16 = sadd.s32 1, %s12
    $region7: #{tpu_custom_call.1} parent=1 // loop_footer_branch
      %11 = sbr.rel target = $region3
    $region8: #{tpu_custom_call.1} parent=1 // loop_exit
      _
    %1060 = vsyncpa [#allocation3], 1
    %s1061 = scalar_lea.sflag [#allocation3], 1
    %1062 = vsyncpa %s1061, 1
    %1063 = vsyncpa [#allocation4], 1
    %s1064 = scalar_lea.sflag [#allocation4], 1
    %1065 = vsyncpa %s1064, 1

</llo_original>
